<compile_context>
chip_gen: v7x
topology: tpu7x:2x2x1
jax: 0.10.0
libtpu: 0.0.40
codegen_flags: <defaults>
</compile_context>

<pallas_src>
import jax
import jax.numpy as jnp
from jax.experimental import pallas as pl
from jax.experimental.pallas import tpu as pltpu


_LANE = 128      # lane width: last-dim multiple for unmasked loads/stores
_SUBLANE = 8     # f32 sublane packing


def _round_up(x, m):
    return (x + m - 1) // m * m


def _gelu_exact(x):
    # torch.nn.GELU default: 0.5 * x * (1 + erf(x / sqrt(2)))
    inv_sqrt2 = jnp.asarray(0.7071067811865476, dtype=x.dtype)
    return 0.5 * x * (1.0 + jax.lax.erf(x * inv_sqrt2))


def mlp_kernel(x_ref, w1_ref, b1_ref, w2_ref, b2_ref, o_ref):
    # x_ref:  (tm, Cp)   tile of tokens (pipelined over the grid)
    # w1_ref: (Cp, Hp)   fc1 weight (in, out), fully resident in VMEM
    # b1_ref: (1, Hp)    fc1 bias
    # w2_ref: (Hp, Op)   fc2 weight (in, out), fully resident in VMEM
    # b2_ref: (1, Op)    fc2 bias
    x = x_ref[...]
    b1 = b1_ref[...]   # read once; broadcast implicitly in the add
    b2 = b2_ref[...]

    h = jnp.dot(x, w1_ref[...], preferred_element_type=jnp.float32) + b1
    h = _gelu_exact(h)
    # Dropout(p=0.0) is the identity -> no-op here.
    o = jnp.dot(h.astype(w2_ref.dtype), w2_ref[...],
                preferred_element_type=jnp.float32) + b2
    o_ref[...] = o.astype(o_ref.dtype)


def mlp_forward(x, w1, b1, w2, b2, *, tm=256):
    """ViT MLP forward: GELU(x @ w1 + b1) @ w2 + b2.

    x:  (B, N, C) tokens, channels-last (as in the PyTorch module)
    w1: (C, H)  fc1 weight, transposed vs. PyTorch's (out, in)
    b1: (H,)
    w2: (H, O)  fc2 weight, transposed
    b2: (O,)
    Returns (B, N, O).
    """
    B, N, C = x.shape
    H = w1.shape[1]
    O = w2.shape[1]
    M = B * N

    # Lane-dense / MXU-friendly padding (zeros do not change the math:
    # padded hidden units get GELU(0) = 0 and padded w2 rows/cols are zero).
    Cp = _round_up(C, _LANE)
    Hp = _round_up(H, _LANE)
    Op = _round_up(O, _LANE)
    tm = max(_SUBLANE, _round_up(min(tm, _round_up(M, _SUBLANE)), _SUBLANE))
    # Keep tm a multiple of 128 when the token count allows it (MXU-native).
    if M >= _LANE:
        tm = _round_up(tm, _LANE)
    Mp = _round_up(M, tm)

    dt = x.dtype
    xf = jnp.zeros((Mp, Cp), dt).at[:M, :C].set(x.reshape(M, C))
    w1p = jnp.zeros((Cp, Hp), w1.dtype).at[:C, :H].set(w1)
    b1p = jnp.zeros((1, Hp), b1.dtype).at[0, :H].set(b1)
    w2p = jnp.zeros((Hp, Op), w2.dtype).at[:H, :O].set(w2)
    b2p = jnp.zeros((1, Op), b2.dtype).at[0, :O].set(b2)

    # --- VMEM budget (weights resident, double-buffered by Pallas default;
    #     x/out tiles double-buffered; f32 hidden tile lives in vregs/VMEM).
    a_bytes = jnp.dtype(dt).itemsize
    w_bytes = jnp.dtype(w1.dtype).itemsize
    vmem_need = (
        2 * tm * Cp * a_bytes                     # x tile, double-buffered
        + 2 * tm * Op * a_bytes                   # out tile, double-buffered
        + 2 * (Cp * Hp + Hp * Op + Hp + Op) * w_bytes  # resident weights+bias
        + tm * Hp * 4                             # f32 hidden intermediate
    )
    vmem_limit = min(int(vmem_need * 1.5) + (4 << 20), 100 << 20)

    # --- Cost estimate for the (unpadded) work so XLA schedules neighbours.
    cost = pl.CostEstimate(
        flops=2 * M * (C * H + H * O),
        transcendentals=M * H,  # one erf per hidden activation
        bytes_accessed=(M * C + C * H + H + H * O + O + M * O) * a_bytes,
    )

    out = pl.pallas_call(
        mlp_kernel,
        out_shape=jax.ShapeDtypeStruct((Mp, Op), dt),
        grid_spec=pltpu.PrefetchScalarGridSpec(
            num_scalar_prefetch=0,
            grid=(Mp // tm,),
            in_specs=[
                pl.BlockSpec((tm, Cp), lambda i: (i, 0)),   # x tile
                pl.BlockSpec((Cp, Hp), lambda i: (0, 0)),   # w1 (resident)
                pl.BlockSpec((1, Hp), lambda i: (0, 0)),    # b1
                pl.BlockSpec((Hp, Op), lambda i: (0, 0)),   # w2 (resident)
                pl.BlockSpec((1, Op), lambda i: (0, 0)),    # b2
            ],
            out_specs=pl.BlockSpec((tm, Op), lambda i: (i, 0)),
        ),
        compiler_params=pltpu.CompilerParams(
            dimension_semantics=("parallel",),
            vmem_limit_bytes=vmem_limit,
        ),
        cost_estimate=cost,
    )(xf, w1p, b1p, w2p, b2p)

    return out[:M, :O].reshape(B, N, O)


def mlp_reference(x, w1, b1, w2, b2):
    h = jnp.einsum("bnc,ch->bnh", x, w1) + b1
    h = _gelu_exact(h)
    return jnp.einsum("bnh,ho->bno", h, w2) + b2


if __name__ == "__main__":
    # Small shapes consistent with the module: batch=2, seq=8,
    # in_features=32, hidden_features=64, out_features=32.
    B, N = 2, 8
    in_features, hidden_features = 32, 64
    out_features = in_features

    key = jax.random.PRNGKey(0)
    k_x, k_w1, k_b1, k_w2, k_b2 = jax.random.split(key, 5)

    x = jax.random.normal(k_x, (B, N, in_features), dtype=jnp.float32)
    # Deterministic synthetic parameters (stored as (in, out) for the kernel).
    w1 = 0.02 * jax.random.normal(k_w1, (in_features, hidden_features), jnp.float32)
    b1 = 0.01 * jax.random.normal(k_b1, (hidden_features,), jnp.float32)
    w2 = 0.02 * jax.random.normal(k_w2, (hidden_features, out_features), jnp.float32)
    b2 = 0.01 * jax.random.normal(k_b2, (out_features,), jnp.float32)

    out = mlp_forward(x, w1, b1, w2, b2)
    out = jax.block_until_ready(out)

    ref = mlp_reference(x, w1, b1, w2, b2)
    assert out.shape == (B, N, out_features)
    assert jnp.allclose(out, ref, atol=1e-5, rtol=1e-5), "mismatch vs reference"

    print("KERNEL_OK")
</pallas_src>

<mosaic_0001>
module attributes {stable_mosaic.version = 11 : i64} {
  func.func @mlp_kernel(%arg0: i32, %arg1: memref<16x128xf32, #tpu.memory_space<vmem>>, %arg2: memref<128x128xf32, #tpu.memory_space<vmem>>, %arg3: memref<1x128xf32, #tpu.memory_space<vmem>>, %arg4: memref<128x128xf32, #tpu.memory_space<vmem>>, %arg5: memref<1x128xf32, #tpu.memory_space<vmem>>, %arg6: memref<16x128xf32, #tpu.memory_space<vmem>>) attributes {dimension_semantics = [#tpu.dimension_semantics<parallel>], iteration_bounds = array<i64: 1>, scalar_prefetch = 0 : i64, scratch_operands = 0 : i64, tpu.core_type = #tpu.core_type<tc>, window_params = [{transform_indices = @transform_0, window_bounds = array<i64: 16, 128>}, {pipeline_mode = #tpu.pipeline_mode<synchronous>, transform_indices = @transform_1, window_bounds = array<i64: 128, 128>}, {pipeline_mode = #tpu.pipeline_mode<synchronous>, transform_indices = @transform_2, window_bounds = array<i64: 1, 128>}, {pipeline_mode = #tpu.pipeline_mode<synchronous>, transform_indices = @transform_3, window_bounds = array<i64: 128, 128>}, {pipeline_mode = #tpu.pipeline_mode<synchronous>, transform_indices = @transform_4, window_bounds = array<i64: 1, 128>}, {transform_indices = @transform_5, window_bounds = array<i64: 16, 128>}]} {
    %c0 = arith.constant 0 : index
    %c0_0 = arith.constant 0 : index
    %0 = vector.load %arg1[%c0, %c0_0] : memref<16x128xf32, #tpu.memory_space<vmem>>, vector<16x128xf32>
    %c0_1 = arith.constant 0 : index
    %c0_2 = arith.constant 0 : index
    %1 = vector.load %arg3[%c0_1, %c0_2] : memref<1x128xf32, #tpu.memory_space<vmem>>, vector<1x128xf32>
    %c0_3 = arith.constant 0 : index
    %c0_4 = arith.constant 0 : index
    %2 = vector.load %arg5[%c0_3, %c0_4] : memref<1x128xf32, #tpu.memory_space<vmem>>, vector<1x128xf32>
    %c0_5 = arith.constant 0 : index
    %c0_6 = arith.constant 0 : index
    %3 = vector.load %arg2[%c0_5, %c0_6] : memref<128x128xf32, #tpu.memory_space<vmem>>, vector<128x128xf32>
    %cst = arith.constant dense<0.000000e+00> : vector<16x128xf32>
    %4 = tpu.matmul %0, %3, %cst {dimension_numbers = #tpu.dot_dimension_numbers<[1], [0], [0], [1], [0, 0, 1, 1], [], []>} : vector<16x128xf32>, vector<128x128xf32>, vector<16x128xf32> -> vector<16x128xf32>
    %5 = vector.broadcast %1 : vector<1x128xf32> to vector<16x128xf32>
    %6 = arith.addf %4, %5 : vector<16x128xf32>
    %cst_7 = arith.constant 5.000000e-01 : f32
    %7 = vector.broadcast %cst_7 : f32 to vector<16x128xf32>
    %8 = arith.mulf %7, %6 : vector<16x128xf32>
    %cst_8 = arith.constant 0.707106769 : f32
    %9 = vector.broadcast %cst_8 : f32 to vector<16x128xf32>
    %10 = arith.mulf %6, %9 : vector<16x128xf32>
    %11 = math.erf %10 : vector<16x128xf32>
    %cst_9 = arith.constant 1.000000e+00 : f32
    %12 = vector.broadcast %cst_9 : f32 to vector<16x128xf32>
    %13 = arith.addf %12, %11 : vector<16x128xf32>
    %14 = arith.mulf %8, %13 : vector<16x128xf32>
    %c0_10 = arith.constant 0 : index
    %c0_11 = arith.constant 0 : index
    %15 = vector.load %arg4[%c0_10, %c0_11] : memref<128x128xf32, #tpu.memory_space<vmem>>, vector<128x128xf32>
    %cst_12 = arith.constant dense<0.000000e+00> : vector<16x128xf32>
    %16 = tpu.matmul %14, %15, %cst_12 {dimension_numbers = #tpu.dot_dimension_numbers<[1], [0], [0], [1], [0, 0, 1, 1], [], []>} : vector<16x128xf32>, vector<128x128xf32>, vector<16x128xf32> -> vector<16x128xf32>
    %17 = vector.broadcast %2 : vector<1x128xf32> to vector<16x128xf32>
    %18 = arith.addf %16, %17 : vector<16x128xf32>
    %c0_13 = arith.constant 0 : index
    %c0_14 = arith.constant 0 : index
    %19 = vector.load %arg6[%c0_13, %c0_14] : memref<16x128xf32, #tpu.memory_space<vmem>>, vector<16x128xf32>
    tpu.vector_store %arg6[%c0_13, %c0_14], %18 {strides = array<i32>} : memref<16x128xf32, #tpu.memory_space<vmem>>, vector<16x128xf32>,
    return
  }
  func.func @transform_0(%arg0: i32) -> (i32, i32) {
    %c0_i32 = arith.constant 0 : i32
    %c0_i32_0 = arith.constant 0 : i32
    return %arg0, %c0_i32 : i32, i32
  }
  func.func @transform_1(%arg0: i32) -> (i32, i32) {
    %c0_i32 = arith.constant 0 : i32
    %c0_i32_0 = arith.constant 0 : i32
    %c0_i32_1 = arith.constant 0 : i32
    return %c0_i32, %c0_i32_0 : i32, i32
  }
  func.func @transform_2(%arg0: i32) -> (i32, i32) {
    %c0_i32 = arith.constant 0 : i32
    %c0_i32_0 = arith.constant 0 : i32
    %c0_i32_1 = arith.constant 0 : i32
    return %c0_i32, %c0_i32_0 : i32, i32
  }
  func.func @transform_3(%arg0: i32) -> (i32, i32) {
    %c0_i32 = arith.constant 0 : i32
    %c0_i32_0 = arith.constant 0 : i32
    %c0_i32_1 = arith.constant 0 : i32
    return %c0_i32, %c0_i32_0 : i32, i32
  }
  func.func @transform_4(%arg0: i32) -> (i32, i32) {
    %c0_i32 = arith.constant 0 : i32
    %c0_i32_0 = arith.constant 0 : i32
    %c0_i32_1 = arith.constant 0 : i32
    return %c0_i32, %c0_i32_0 : i32, i32
  }
  func.func @transform_5(%arg0: i32) -> (i32, i32) {
    %c0_i32 = arith.constant 0 : i32
    %c0_i32_0 = arith.constant 0 : i32
    return %arg0, %c0_i32 : i32, i32
  }
}

</mosaic_0001>

<llo_original>
// kernel: tpu_custom_call.1
$region0: #{tpu_custom_call.1}
  #allocation0 [shape = 'u32[]', space=smem, size = 0x4, offset = 0x4, fixed_abs, tag = 'smem constant byte address 0x4 - core index']
  #allocation1 [shape = 'u32[144,128]{1,0:T(1,128)}', space=vmem, size = 0x12000, scoped, tag = 'internal scratch']
  %s0 = inlined_call_operand.hbm [shape: f32[16,128], index: 0, kind: input, shape index: {}]
  %s1 = inlined_call_operand.hbm [shape: f32[128,128], index: 1, kind: input, shape index: {}]
  %s2 = inlined_call_operand.vmem [shape: f32[1,128], index: 2, kind: input, shape index: {}]
  %s3 = inlined_call_operand.hbm [shape: f32[128,128], index: 3, kind: input, shape index: {}]
  %s4 = inlined_call_operand.vmem [shape: f32[1,128], index: 4, kind: input, shape index: {}]
  %s5 = inlined_call_operand.hbm [shape: f32[16,128], index: 5, kind: output, shape index: {}]
  %s6 = sld [smem:[#allocation0]]
  $region42: #{tpu_custom_call.1} parent=0
    _
  %s8 = ssub.s32 1, %s6
  %s9 = scalar_select 0, %s8, %s6
  $region1: #{tpu_custom_call.1} parent=0
    #allocation2 [shape = 'u8[8192]{0}', space=vmem, size = 0x2000, scoped, tag = 'input window, operand 0, single buffered']
    #allocation3 [shape = 's32[1]{0}', space=sflag, size = 0x4, scoped, tag = 'scoped memory for tpu_custom_call.1']
    #allocation4 [shape = 's32[1]{0}', space=sflag, size = 0x4, scoped, tag = 'scoped memory for tpu_custom_call.1']
    #allocation5 [shape = 'u8[65536]{0}', space=vmem, size = 0x10000, scoped, tag = 'input window, operand 1, single buffered']
    #allocation6 [shape = 's32[1]{0}', space=sflag, size = 0x4, scoped, tag = 'scoped memory for tpu_custom_call.1']
    #allocation7 [shape = 'u8[65536]{0}', space=vmem, size = 0x10000, scoped, tag = 'input window, operand 3, single buffered']
    #allocation8 [shape = 'u8[8192]{0}', space=vmem, size = 0x2000, scoped, tag = 'output window, operand 0, single buffered']
    %10 = vsyncpa [#allocation3], 0
    %11 = vsyncpa [#allocation6], 0
    %12 = vsyncpa [#allocation4], 0
    // Predicated region
    $region2: #{tpu_custom_call.1} parent=1 // pred_check
      _
    $region3: #{tpu_custom_call.1} parent=1 // pred_check_branch
      %14 = sbr.rel (0) target = $region5
    $region4: #{tpu_custom_call.1} parent=1 // pred_region
      %s16 = ssub.s32 256, 256
      %17 = vsyncadd [#allocation3], %s16
      %s18 = sshll.u32 [#allocation2], 4
      %s19 = int_to_ptr.vmem [resolvable:$true] %s18
      %24 = dma.hbm_to_vmem [thread:$0]  %s0, 256, %s19, [#allocation3], 128, 128, 8
    $region5: #{tpu_custom_call.1} parent=1 // pred_fallthru
      _
    // Predicated region
    $region6: #{tpu_custom_call.1} parent=1 // pred_check
      _
    $region7: #{tpu_custom_call.1} parent=1 // pred_check_branch
      %26 = sbr.rel (0) target = $region9
    $region8: #{tpu_custom_call.1} parent=1 // pred_region
      %s28 = ssub.s32 2048, 2048
      %29 = vsyncadd [#allocation6], %s28
      %s30 = sshll.u32 [#allocation5], 4
      %s31 = int_to_ptr.vmem [resolvable:$true] %s30
      %36 = dma.hbm_to_vmem [thread:$0]  %s1, 2048, %s31, [#allocation6], 128, 128, 8
    $region9: #{tpu_custom_call.1} parent=1 // pred_fallthru
      _
    // Predicated region
    $region10: #{tpu_custom_call.1} parent=1 // pred_check
      _
    $region11: #{tpu_custom_call.1} parent=1 // pred_check_branch
      %38 = sbr.rel (0) target = $region13
    $region12: #{tpu_custom_call.1} parent=1 // pred_region
      _
    $region13: #{tpu_custom_call.1} parent=1 // pred_fallthru
      _
    // Predicated region
    $region14: #{tpu_custom_call.1} parent=1 // pred_check
      _
    $region15: #{tpu_custom_call.1} parent=1 // pred_check_branch
      %40 = sbr.rel (0) target = $region17
    $region16: #{tpu_custom_call.1} parent=1 // pred_region
      %s42 = ssub.s32 2048, 2048
      %43 = vsyncadd [#allocation6], %s42
      %s44 = sshll.u32 [#allocation7], 4
      %s45 = int_to_ptr.vmem [resolvable:$true] %s44
      %50 = dma.hbm_to_vmem [thread:$0]  %s3, 2048, %s45, [#allocation6], 128, 128, 8
    $region17: #{tpu_custom_call.1} parent=1 // pred_fallthru
      _
    // Predicated region
    $region18: #{tpu_custom_call.1} parent=1 // pred_check
      _
    $region19: #{tpu_custom_call.1} parent=1 // pred_check_branch
      %52 = sbr.rel (0) target = $region21
    $region20: #{tpu_custom_call.1} parent=1 // pred_region
      _
    $region21: #{tpu_custom_call.1} parent=1 // pred_fallthru
      _
    // Predicated region
    $region22: #{tpu_custom_call.1} parent=1 // pred_check
      _
    $region23: #{tpu_custom_call.1} parent=1 // pred_check_branch
      %54 = sbr.rel (0) target = $region25
    $region24: #{tpu_custom_call.1} parent=1 // pred_region
      %55 = dma.done [#allocation3], 256
    $region25: #{tpu_custom_call.1} parent=1 // pred_fallthru
      _
    // Predicated region
    $region26: #{tpu_custom_call.1} parent=1 // pred_check
      _
    $region27: #{tpu_custom_call.1} parent=1 // pred_check_branch
      %57 = sbr.rel (0) target = $region29
    $region28: #{tpu_custom_call.1} parent=1 // pred_region
      %58 = dma.done [#allocation6], 2048
    $region29: #{tpu_custom_call.1} parent=1 // pred_fallthru
      _
    // Predicated region
    $region30: #{tpu_custom_call.1} parent=1 // pred_check
      _
    $region31: #{tpu_custom_call.1} parent=1 // pred_check_branch
      %60 = sbr.rel (0) target = $region33
    $region32: #{tpu_custom_call.1} parent=1 // pred_region
      %61 = dma.done [#allocation6], 2048
    $region33: #{tpu_custom_call.1} parent=1 // pred_fallthru
      _
    %v62 = vld [vmem:[#allocation2] sm:$0xff]
    %v63 = vld [vmem:[#allocation2 + $0x8] sm:$0xff]
    %v64 = vld [vmem:[%s2] sm:$0x1]
    %v65 = vld [vmem:[%s4] sm:$0x1]
    %v66 = vld [vmem:[#allocation5] sm:$0xff]
    %v67 = vld [vmem:[#allocation5 + $0x8] sm:$0xff]
    %v68 = vld [vmem:[#allocation5 + $0x10] sm:$0xff]
    %v69 = vld [vmem:[#allocation5 + $0x18] sm:$0xff]
    %v70 = vld [vmem:[#allocation5 + $0x20] sm:$0xff]
    %v71 = vld [vmem:[#allocation5 + $0x28] sm:$0xff]
    %v72 = vld [vmem:[#allocation5 + $0x30] sm:$0xff]
    %v73 = vld [vmem:[#allocation5 + $0x38] sm:$0xff]
    %v74 = vld [vmem:[#allocation5 + $0x40] sm:$0xff]
    %v75 = vld [vmem:[#allocation5 + $0x48] sm:$0xff]
    %v76 = vld [vmem:[#allocation5 + $0x50] sm:$0xff]
    %v77 = vld [vmem:[#allocation5 + $0x58] sm:$0xff]
    %v78 = vld [vmem:[#allocation5 + $0x60] sm:$0xff]
    %v79 = vld [vmem:[#allocation5 + $0x68] sm:$0xff]
    %v80 = vld [vmem:[#allocation5 + $0x70] sm:$0xff]
    %v81 = vld [vmem:[#allocation5 + $0x78] sm:$0xff]
    %v83 = vlaneseq
    %v84 = vshrl.u32 %v83, 7
    %v85 = vsub.s32 0, %v84
    %v86 = vrot.slane %v64, %v85
    %88 = vmatprep.subr.mxu0 0.0
    %89 = vmatpush1.msra.mxu0 %v66
    %90 = vmatprep.subr.mxu0 0.0
    %91 = vmatpush1.msra.mxu0 %v67
    %92 = vmatprep.subr.mxu0 0.0
    %93 = vmatpush1.msra.mxu0 %v68
    %94 = vmatprep.subr.mxu0 0.0
    %95 = vmatpush1.msra.mxu0 %v69
    %96 = vmatprep.subr.mxu0 0.0
    %97 = vmatpush1.msra.mxu0 %v70
    %98 = vmatprep.subr.mxu0 0.0
    %99 = vmatpush1.msra.mxu0 %v71
    %100 = vmatprep.subr.mxu0 0.0
    %101 = vmatpush1.msra.mxu0 %v72
    %102 = vmatprep.subr.mxu0 0.0
    %103 = vmatpush1.msra.mxu0 %v73
    %104 = vmatprep.subr.mxu0 0.0
    %105 = vmatpush1.msra.mxu0 %v74
    %106 = vmatprep.subr.mxu0 0.0
    %107 = vmatpush1.msra.mxu0 %v75
    %108 = vmatprep.subr.mxu0 0.0
    %109 = vmatpush1.msra.mxu0 %v76
    %110 = vmatprep.subr.mxu0 0.0
    %111 = vmatpush1.msra.mxu0 %v77
    %112 = vmatprep.subr.mxu0 0.0
    %113 = vmatpush1.msra.mxu0 %v78
    %114 = vmatprep.subr.mxu0 0.0
    %115 = vmatpush1.msra.mxu0 %v79
    %116 = vmatprep.subr.mxu0 0.0
    %117 = vmatpush1.msra.mxu0 %v80
    %118 = vmatprep.subr.mxu0 0.0
    %119 = vmatpush1.msra.mxu0 %v81
    %120 = vmatprep.subr.mxu0 0.0
    %121 = vmatpush1.msra.mxu0 0.0
    %122 = vmatprep.subr.mxu0 0.0
    %123 = vmatpush1.msra.mxu0 0.0
    %124 = vmatprep.subr.mxu0 0.0
    %125 = vmatpush1.msra.mxu0 0.0
    %126 = vmatprep.subr.mxu0 0.0
    %127 = vmatpush1.msra.mxu0 0.0
    %128 = vmatprep.subr.mxu0 0.0
    %129 = vmatpush1.msra.mxu0 0.0
    %130 = vmatprep.subr.mxu0 0.0
    %131 = vmatpush1.msra.mxu0 0.0
    %132 = vmatprep.subr.mxu0 0.0
    %133 = vmatpush1.msra.mxu0 0.0
    %134 = vmatprep.subr.mxu0 0.0
    %135 = vmatpush1.msra.mxu0 0.0
    %136 = vmatprep.subr.mxu0 0.0
    %137 = vmatpush1.msra.mxu0 0.0
    %138 = vmatprep.subr.mxu0 0.0
    %139 = vmatpush1.msra.mxu0 0.0
    %140 = vmatprep.subr.mxu0 0.0
    %141 = vmatpush1.msra.mxu0 0.0
    %142 = vmatprep.subr.mxu0 0.0
    %143 = vmatpush1.msra.mxu0 0.0
    %144 = vmatprep.subr.mxu0 0.0
    %145 = vmatpush1.msra.mxu0 0.0
    %146 = vmatprep.subr.mxu0 0.0
    %147 = vmatpush1.msra.mxu0 0.0
    %148 = vmatprep.subr.mxu0 0.0
    %149 = vmatpush1.msra.mxu0 0.0
    %150 = vmatprep.subr.mxu0 0.0
    %151 = vmatpush1.msra.mxu0 0.0
    %152 = vmatprep.mubr.f32.mxu0 0.0
    %153 = vmatmul.mubr.f32.gmra.mrb[0].mxu0 %v62
    %v154 = vpop.f32.mrb[0].mxu0
    %v155 = vadd.f32 %v86, %v154
    %v156 = vpop.f32.mrb[0].mxu0
    %157 = vmatprep.mubr.f32.mxu0 0.0
    %158 = vmatmul.mubr.f32.gmra.mrb[0].mxu0 %v63
    %v159 = vpop.f32.mrb[0].mxu0
    %v160 = vadd.f32 %v86, %v159
    %v161 = vpop.f32.mrb[0].mxu0
    %162 = vdwg.mxu0
    %v163 = vmul.f32 %v155, 0.5
    %v164 = vmul.f32 %v160, 0.5
    %v165 = vmul.f32 %v155, 0.70710677
    %v166 = vmul.f32 %v160, 0.70710677
    %v167 = verf.f32.pop %v165
    %v168 = verf.f32.pop %v166
    %v169 = vadd.f32 %v167, 1.0
    %v170 = vadd.f32 %v168, 1.0
    %v171 = vmul.f32 %v163, %v169
    %v172 = vmul.f32 %v164, %v170
    %v173 = vld [vmem:[#allocation7] sm:$0xff]
    %v174 = vld [vmem:[#allocation7 + $0x8] sm:$0xff]
    %v175 = vld [vmem:[#allocation7 + $0x10] sm:$0xff]
    %v176 = vld [vmem:[#allocation7 + $0x18] sm:$0xff]
    %v177 = vld [vmem:[#allocation7 + $0x20] sm:$0xff]
    %v178 = vld [vmem:[#allocation7 + $0x28] sm:$0xff]
    %v179 = vld [vmem:[#allocation7 + $0x30] sm:$0xff]
    %v180 = vld [vmem:[#allocation7 + $0x38] sm:$0xff]
    %v181 = vld [vmem:[#allocation7 + $0x40] sm:$0xff]
    %v182 = vld [vmem:[#allocation7 + $0x48] sm:$0xff]
    %v183 = vld [vmem:[#allocation7 + $0x50] sm:$0xff]
    %v184 = vld [vmem:[#allocation7 + $0x58] sm:$0xff]
    %v185 = vld [vmem:[#allocation7 + $0x60] sm:$0xff]
    %v186 = vld [vmem:[#allocation7 + $0x68] sm:$0xff]
    %v187 = vld [vmem:[#allocation7 + $0x70] sm:$0xff]
    %v188 = vld [vmem:[#allocation7 + $0x78] sm:$0xff]
    %v190 = vlaneseq
    %v191 = vshrl.u32 %v190, 7
    %v192 = vsub.s32 0, %v191
    %v193 = vrot.slane %v65, %v192
    %195 = vmatprep.subr.mxu0 0.0
    %196 = vmatpush1.msra.mxu0 %v173
    %197 = vmatprep.subr.mxu0 0.0
    %198 = vmatpush1.msra.mxu0 %v174
    %199 = vmatprep.subr.mxu0 0.0
    %200 = vmatpush1.msra.mxu0 %v175
    %201 = vmatprep.subr.mxu0 0.0
    %202 = vmatpush1.msra.mxu0 %v176
    %203 = vmatprep.subr.mxu0 0.0
    %204 = vmatpush1.msra.mxu0 %v177
    %205 = vmatprep.subr.mxu0 0.0
    %206 = vmatpush1.msra.mxu0 %v178
    %207 = vmatprep.subr.mxu0 0.0
    %208 = vmatpush1.msra.mxu0 %v179
    %209 = vmatprep.subr.mxu0 0.0
    %210 = vmatpush1.msra.mxu0 %v180
    %211 = vmatprep.subr.mxu0 0.0
    %212 = vmatpush1.msra.mxu0 %v181
    %213 = vmatprep.subr.mxu0 0.0
    %214 = vmatpush1.msra.mxu0 %v182
    %215 = vmatprep.subr.mxu0 0.0
    %216 = vmatpush1.msra.mxu0 %v183
    %217 = vmatprep.subr.mxu0 0.0
    %218 = vmatpush1.msra.mxu0 %v184
    %219 = vmatprep.subr.mxu0 0.0
    %220 = vmatpush1.msra.mxu0 %v185
    %221 = vmatprep.subr.mxu0 0.0
    %222 = vmatpush1.msra.mxu0 %v186
    %223 = vmatprep.subr.mxu0 0.0
    %224 = vmatpush1.msra.mxu0 %v187
    %225 = vmatprep.subr.mxu0 0.0
    %226 = vmatpush1.msra.mxu0 %v188
    %227 = vmatprep.subr.mxu0 0.0
    %228 = vmatpush1.msra.mxu0 0.0
    %229 = vmatprep.subr.mxu0 0.0
    %230 = vmatpush1.msra.mxu0 0.0
    %231 = vmatprep.subr.mxu0 0.0
    %232 = vmatpush1.msra.mxu0 0.0
    %233 = vmatprep.subr.mxu0 0.0
    %234 = vmatpush1.msra.mxu0 0.0
    %235 = vmatprep.subr.mxu0 0.0
    %236 = vmatpush1.msra.mxu0 0.0
    %237 = vmatprep.subr.mxu0 0.0
    %238 = vmatpush1.msra.mxu0 0.0
    %239 = vmatprep.subr.mxu0 0.0
    %240 = vmatpush1.msra.mxu0 0.0
    %241 = vmatprep.subr.mxu0 0.0
    %242 = vmatpush1.msra.mxu0 0.0
    %243 = vmatprep.subr.mxu0 0.0
    %244 = vmatpush1.msra.mxu0 0.0
    %245 = vmatprep.subr.mxu0 0.0
    %246 = vmatpush1.msra.mxu0 0.0
    %247 = vmatprep.subr.mxu0 0.0
    %248 = vmatpush1.msra.mxu0 0.0
    %249 = vmatprep.subr.mxu0 0.0
    %250 = vmatpush1.msra.mxu0 0.0
    %251 = vmatprep.subr.mxu0 0.0
    %252 = vmatpush1.msra.mxu0 0.0
    %253 = vmatprep.subr.mxu0 0.0
    %254 = vmatpush1.msra.mxu0 0.0
    %255 = vmatprep.subr.mxu0 0.0
    %256 = vmatpush1.msra.mxu0 0.0
    %257 = vmatprep.subr.mxu0 0.0
    %258 = vmatpush1.msra.mxu0 0.0
    %259 = vmatprep.mubr.f32.mxu0 0.0
    %260 = vmatmul.mubr.f32.gmra.mrb[0].mxu0 %v171
    %v261 = vpop.f32.mrb[0].mxu0
    %v262 = vadd.f32 %v193, %v261
    %v263 = vpop.f32.mrb[0].mxu0
    %264 = vmatprep.mubr.f32.mxu0 0.0
    %265 = vmatmul.mubr.f32.gmra.mrb[0].mxu0 %v172
    %v266 = vpop.f32.mrb[0].mxu0
    %v267 = vadd.f32 %v193, %v266
    %v268 = vpop.f32.mrb[0].mxu0
    %269 = vdwg.mxu0
    %270 = vst [vmem:[#allocation8] sm:$0xff] %v262
    %271 = vst [vmem:[#allocation8 + $0x8] sm:$0xff] %v267
    // Predicated region
    $region34: #{tpu_custom_call.1} parent=1 // pred_check
      _
    $region35: #{tpu_custom_call.1} parent=1 // pred_check_branch
      %273 = sbr.rel (0) target = $region37
    $region36: #{tpu_custom_call.1} parent=1 // pred_region
      %s275 = ssub.s32 256, 256
      %276 = vsyncadd [#allocation4], %s275
      %s277 = sshll.u32 [#allocation8], 4
      %s278 = int_to_ptr.vmem [resolvable:$true] %s277
      %283 = dma.vmem_to_hbm [thread:$0]  %s278, 256, %s5, [#allocation4], 128, 128, 8
    $region37: #{tpu_custom_call.1} parent=1 // pred_fallthru
      _
    // Predicated region
    $region38: #{tpu_custom_call.1} parent=1 // pred_check
      _
    $region39: #{tpu_custom_call.1} parent=1 // pred_check_branch
      %285 = sbr.rel (0) target = $region41
    $region40: #{tpu_custom_call.1} parent=1 // pred_region
      %286 = dma.done [#allocation4], 256
    $region41: #{tpu_custom_call.1} parent=1 // pred_fallthru
      _
    %287 = vsyncpa [#allocation3], 1
    %288 = vsyncpa [#allocation6], 1
    %289 = vsyncpa [#allocation4], 1

</llo_original>
